<compile_context>
chip_gen: v7x
topology: tpu7x:2x2x1
jax: 0.10.0
libtpu: 0.0.40
codegen_flags: <defaults>
</compile_context>

<pallas_src>
import functools

import jax
import jax.numpy as jnp
from jax.experimental import pallas as pl
from jax.experimental.pallas import tpu as pltpu

_LANE = 128
_SUBLANE = 8


def _ceil_div(a: int, b: int) -> int:
    return -(-a // b)


def _l1_sum_kernel(r_ref, o_ref, out_ref, *, block_rows, steps_per_core,
                   total_rows, apply_mask):
    """Accumulates sum(|r - o|) into a resident (8, 128) f32 output block."""
    c = pl.program_id(0)  # partial index ("parallel" axis; megacore split on v7x)
    i = pl.program_id(1)  # reduction step ("arbitrary" axis)

    @pl.when(i == 0)
    def _():
        out_ref[...] = jnp.zeros_like(out_ref)

    r = r_ref[...].astype(jnp.float32)
    o = o_ref[...].astype(jnp.float32)
    absdiff = jnp.abs(r - o)  # (block_rows, 128) f32

    if apply_mask:
        # Zero out rows beyond the real input: the partial trailing block and/or
        # duplicated (index-clamped) blocks on the second partial.
        block_idx = c * steps_per_core + i
        row_ids = block_idx * block_rows + jax.lax.broadcasted_iota(
            jnp.int32, (block_rows, 1), 0)
        absdiff = jnp.where(row_ids < total_rows, absdiff, 0.0)

    # (block_rows, 128) -> (block_rows//8, 8, 128), reduce the leading dim with
    # plain VPU adds; the single cross-lane reduce happens outside the kernel.
    partial_sum = absdiff.reshape(block_rows // _SUBLANE, _SUBLANE, _LANE).sum(axis=0)
    out_ref[...] += partial_sum


def cycle_loss(reconstruction, original, *, block_rows=2048, num_partials=2):
    """L1 loss (mean absolute element-wise difference); exact nn.L1Loss() semantics."""
    assert reconstruction.shape == original.shape, (
        "shapes must match (no broadcasting in nn.L1Loss here)")
    n_elems = reconstruction.size
    assert n_elems > 0

    r_flat = reconstruction.reshape(-1)
    o_flat = original.reshape(-1)

    # Pad only to (8 * 128) granularity so the flat buffer reshapes into a
    # lane-dense (rows, 128) slab with rows % 8 == 0.  For typical image batches
    # this is a no-op (no extra HBM round trip); padded zeros contribute |0-0|=0.
    chunk = _SUBLANE * _LANE
    padded_len = _ceil_div(n_elems, chunk) * chunk
    pad = padded_len - n_elems
    if pad:
        r_flat = jnp.pad(r_flat, (0, pad))
        o_flat = jnp.pad(o_flat, (0, pad))

    rows = padded_len // _LANE  # multiple of 8
    r2d = r_flat.reshape(rows, _LANE)
    o2d = o_flat.reshape(rows, _LANE)

    # Block size: as large as the data allows (up to block_rows), multiple of 8.
    # Default 2048 rows => 1 MiB f32 per input block; 2 inputs x 2 pipeline
    # buffers = 4 MiB VMEM, safe on v5e (16 MiB scoped default) and v7x (64 MiB).
    eff_block_rows = min(block_rows, rows)
    eff_block_rows = max(_SUBLANE, (eff_block_rows // _SUBLANE) * _SUBLANE)

    total_blocks = _ceil_div(rows, eff_block_rows)
    n_partials = max(1, min(num_partials, total_blocks))
    steps_per_core = _ceil_div(total_blocks, n_partials)

    # Mask is needed whenever the grid covers more rows than the real input
    # (partial trailing block and/or clamped duplicate blocks on partial > 0).
    apply_mask = (n_partials * steps_per_core * eff_block_rows) != rows
    last_block = total_blocks - 1

    def in_index_map(c, i):
        # Clamp so no DMA ever starts past the end of the array; duplicated
        # (clamped) blocks are fully zeroed by the in-kernel row mask.
        return (jnp.minimum(c * steps_per_core + i, last_block), 0)

    kernel = functools.partial(
        _l1_sum_kernel,
        block_rows=eff_block_rows,
        steps_per_core=steps_per_core,
        total_rows=rows,
        apply_mask=apply_mask,
    )

    elem_bytes = reconstruction.dtype.itemsize
    cost = pl.CostEstimate(
        flops=3 * n_elems,
        transcendentals=0,
        bytes_accessed=2 * n_elems * elem_bytes + n_partials * _SUBLANE * _LANE * 4,
    )

    partials = pl.pallas_call(
        kernel,
        out_shape=jax.ShapeDtypeStruct((n_partials, _SUBLANE, _LANE), jnp.float32),
        grid_spec=pltpu.PrefetchScalarGridSpec(
            num_scalar_prefetch=0,
            grid=(n_partials, steps_per_core),
            in_specs=[
                pl.BlockSpec((eff_block_rows, _LANE), in_index_map),
                pl.BlockSpec((eff_block_rows, _LANE), in_index_map),
            ],
            out_specs=pl.BlockSpec((None, _SUBLANE, _LANE), lambda c, i: (c, 0, 0)),
        ),
        compiler_params=pltpu.CompilerParams(
            dimension_semantics=("parallel", "arbitrary"),
        ),
        cost_estimate=cost,
    )(r2d, o2d)

    # Single small cross-lane reduce of the resident partials, done in plain JAX.
    total = jnp.sum(partials, dtype=jnp.float32)
    return total / jnp.float32(n_elems)


def _check(reconstruction, original, **kw):
    loss = jax.block_until_ready(cycle_loss(reconstruction, original, **kw))
    ref = jnp.mean(jnp.abs(reconstruction.astype(jnp.float32)
                           - original.astype(jnp.float32)))
    assert jnp.allclose(loss, ref, atol=1e-5, rtol=1e-5), (loss, ref)
    return loss


if __name__ == "__main__":
    key = jax.random.PRNGKey(0)
    k1, k2, k3, k4 = jax.random.split(key, 4)

    # NCHW, small shapes consistent with the CycleGAN module: batch=2, channels=4, 16x16.
    reconstruction = jax.random.normal(k1, (2, 4, 16, 16), dtype=jnp.float32)
    original = jax.random.normal(k2, (2, 4, 16, 16), dtype=jnp.float32)
    _check(reconstruction, original)

    # Ragged element count (exercises the 8x128 tail padding path).
    r_ragged = jax.random.normal(k3, (2, 3, 15, 17), dtype=jnp.float32)
    o_ragged = jax.random.normal(k4, (2, 3, 15, 17), dtype=jnp.float32)
    _check(r_ragged, o_ragged)

    # Small block size + 2-way partial split (exercises mask + clamped index_map).
    _check(reconstruction, original, block_rows=8, num_partials=2)

    print("KERNEL_OK")
</pallas_src>

<mosaic_0001>
module attributes {stable_mosaic.version = 11 : i64} {
  func.func @_l1_sum_kernel(%arg0: i32, %arg1: i32, %arg2: memref<16x128xf32, #tpu.memory_space<vmem>>, %arg3: memref<16x128xf32, #tpu.memory_space<vmem>>, %arg4: memref<1x8x128xf32, #tpu.memory_space<vmem>>) attributes {dimension_semantics = [#tpu.dimension_semantics<parallel>, #tpu.dimension_semantics<arbitrary>], iteration_bounds = array<i64: 1, 1>, scalar_prefetch = 0 : i64, scratch_operands = 0 : i64, tpu.core_type = #tpu.core_type<tc>, window_params = [{transform_indices = @transform_0, window_bounds = array<i64: 16, 128>}, {transform_indices = @transform_1, window_bounds = array<i64: 16, 128>}, {transform_indices = @transform_2, window_bounds = array<i64: 1, 8, 128>}]} {
    %c0_i32 = arith.constant 0 : i32
    %0 = arith.cmpi eq, %arg1, %c0_i32 : i32
    %1 = arith.extui %0 : i1 to i32
    %c0_i32_0 = arith.constant 0 : i32
    %2 = arith.cmpi ne, %1, %c0_i32_0 : i32
    scf.if %2 {
      %cst_10 = arith.constant 0.000000e+00 : f32
      %15 = vector.broadcast %cst_10 : f32 to vector<8x128xf32>
      %c0_11 = arith.constant 0 : index
      %c0_12 = arith.constant 0 : index
      %c0_13 = arith.constant 0 : index
      %16 = vector.load %arg4[%c0_11, %c0_12, %c0_13] : memref<1x8x128xf32, #tpu.memory_space<vmem>>, vector<1x8x128xf32>
      %17 = vector.shape_cast %16 : vector<1x8x128xf32> to vector<8x128xf32>
      %18 = vector.shape_cast %15 : vector<8x128xf32> to vector<1x8x128xf32>
      tpu.vector_store %arg4[%c0_11, %c0_12, %c0_13], %18 {strides = array<i32>} : memref<1x8x128xf32, #tpu.memory_space<vmem>>, vector<1x8x128xf32>,
    } else {
    }
    %c0 = arith.constant 0 : index
    %c0_1 = arith.constant 0 : index
    %3 = vector.load %arg2[%c0, %c0_1] : memref<16x128xf32, #tpu.memory_space<vmem>>, vector<16x128xf32>
    %c0_2 = arith.constant 0 : index
    %c0_3 = arith.constant 0 : index
    %4 = vector.load %arg3[%c0_2, %c0_3] : memref<16x128xf32, #tpu.memory_space<vmem>>, vector<16x128xf32>
    %5 = arith.subf %3, %4 : vector<16x128xf32>
    %6 = math.absf %5 : vector<16x128xf32>
    %7 = vector.shape_cast %6 : vector<16x128xf32> to vector<2x8x128xf32>
    %cst = arith.constant dense<0.000000e+00> : vector<8x128xf32>
    %8 = vector.multi_reduction <add>, %7, %cst [0] : vector<2x8x128xf32> to vector<8x128xf32>
    %c0_4 = arith.constant 0 : index
    %c0_5 = arith.constant 0 : index
    %c0_6 = arith.constant 0 : index
    %9 = vector.load %arg4[%c0_4, %c0_5, %c0_6] : memref<1x8x128xf32, #tpu.memory_space<vmem>>, vector<1x8x128xf32>
    %10 = vector.shape_cast %9 : vector<1x8x128xf32> to vector<8x128xf32>
    %11 = arith.addf %10, %8 : vector<8x128xf32>
    %c0_7 = arith.constant 0 : index
    %c0_8 = arith.constant 0 : index
    %c0_9 = arith.constant 0 : index
    %12 = vector.load %arg4[%c0_7, %c0_8, %c0_9] : memref<1x8x128xf32, #tpu.memory_space<vmem>>, vector<1x8x128xf32>
    %13 = vector.shape_cast %12 : vector<1x8x128xf32> to vector<8x128xf32>
    %14 = vector.shape_cast %11 : vector<8x128xf32> to vector<1x8x128xf32>
    tpu.vector_store %arg4[%c0_7, %c0_8, %c0_9], %14 {strides = array<i32>} : memref<1x8x128xf32, #tpu.memory_space<vmem>>, vector<1x8x128xf32>,
    return
  }
  func.func @transform_0(%arg0: i32, %arg1: i32) -> (i32, i32) {
    %c1_i32 = arith.constant 1 : i32
    %0 = arith.muli %arg0, %c1_i32 : i32
    %1 = arith.addi %0, %arg1 : i32
    %c0_i32 = arith.constant 0 : i32
    %2 = arith.minsi %1, %c0_i32 : i32
    %c0_i32_0 = arith.constant 0 : i32
    %c0_i32_1 = arith.constant 0 : i32
    return %2, %c0_i32_0 : i32, i32
  }
  func.func @transform_1(%arg0: i32, %arg1: i32) -> (i32, i32) {
    %c1_i32 = arith.constant 1 : i32
    %0 = arith.muli %arg0, %c1_i32 : i32
    %1 = arith.addi %0, %arg1 : i32
    %c0_i32 = arith.constant 0 : i32
    %2 = arith.minsi %1, %c0_i32 : i32
    %c0_i32_0 = arith.constant 0 : i32
    %c0_i32_1 = arith.constant 0 : i32
    return %2, %c0_i32_0 : i32, i32
  }
  func.func @transform_2(%arg0: i32, %arg1: i32) -> (i32, i32, i32) {
    %c0_i32 = arith.constant 0 : i32
    %c0_i32_0 = arith.constant 0 : i32
    %c0_i32_1 = arith.constant 0 : i32
    return %arg0, %c0_i32, %c0_i32_0 : i32, i32, i32
  }
}

</mosaic_0001>

<llo_original>
// kernel: tpu_custom_call.1
$region0: #{tpu_custom_call.1}
  #allocation0 [shape = 'u32[]', space=smem, size = 0x4, offset = 0x4, fixed_abs, tag = 'smem constant byte address 0x4 - core index']
  #allocation1 [shape = 'u32[144,128]{1,0:T(1,128)}', space=vmem, size = 0x12000, scoped, tag = 'internal scratch']
  %s0 = inlined_call_operand.hbm [shape: f32[16,128], index: 0, kind: input, shape index: {}]
  %s1 = inlined_call_operand.hbm [shape: f32[16,128], index: 1, kind: input, shape index: {}]
  %s2 = inlined_call_operand.hbm [shape: f32[1,8,128], index: 2, kind: output, shape index: {}]
  %s3 = sld [smem:[#allocation0]]
  $region30: #{tpu_custom_call.1} parent=0
    _
  %s5 = ssub.s32 1, %s3
  %s6 = scalar_select 0, %s5, %s3
  $region1: #{tpu_custom_call.1} parent=0
    #allocation2 [shape = 'u8[8192]{0}', space=vmem, size = 0x2000, scoped, tag = 'input window, operand 0, single buffered']
    #allocation3 [shape = 's32[1]{0}', space=sflag, size = 0x4, scoped, tag = 'scoped memory for tpu_custom_call.1']
    #allocation4 [shape = 's32[1]{0}', space=sflag, size = 0x4, scoped, tag = 'scoped memory for tpu_custom_call.1']
    #allocation5 [shape = 'u8[8192]{0}', space=vmem, size = 0x2000, scoped, tag = 'input window, operand 1, single buffered']
    #allocation6 [shape = 's32[1]{0}', space=sflag, size = 0x4, scoped, tag = 'scoped memory for tpu_custom_call.1']
    #allocation7 [shape = 'u8[4096]{0}', space=vmem, size = 0x1000, scoped, tag = 'output window, operand 0, single buffered']
    %7 = vsyncpa [#allocation3], 0
    %8 = vsyncpa [#allocation6], 0
    %9 = vsyncpa [#allocation4], 0
    // Predicated region
    $region2: #{tpu_custom_call.1} parent=1 // pred_check
      _
    $region3: #{tpu_custom_call.1} parent=1 // pred_check_branch
      %11 = sbr.rel (0) target = $region5
    $region4: #{tpu_custom_call.1} parent=1 // pred_region
      %s12 = sadd.s32 0, 0
      %p13 = scmp.lt.s32.totalorder %s12, 0
      %s14 = scalar_select %p13, %s12, 0
      %s15 = smul.u32 2, %s14
      %s17 = ssub.s32 256, 256
      %18 = vsyncadd [#allocation3], %s17
      %s19 = smul.addr %s15, 128
      %s20 = scalar_lea.hbm %s0, %s19
      %s21 = sshll.u32 [#allocation2], 4
      %s22 = int_to_ptr.vmem [resolvable:$true] %s21
      %27 = dma.hbm_to_vmem [thread:$0]  %s20, 256, %s22, [#allocation3], 128, 128, 8
    $region5: #{tpu_custom_call.1} parent=1 // pred_fallthru
      _
    // Predicated region
    $region6: #{tpu_custom_call.1} parent=1 // pred_check
      _
    $region7: #{tpu_custom_call.1} parent=1 // pred_check_branch
      %29 = sbr.rel (0) target = $region9
    $region8: #{tpu_custom_call.1} parent=1 // pred_region
      %s30 = sadd.s32 0, 0
      %p31 = scmp.lt.s32.totalorder %s30, 0
      %s32 = scalar_select %p31, %s30, 0
      %s33 = smul.u32 2, %s32
      %s35 = ssub.s32 256, 256
      %36 = vsyncadd [#allocation6], %s35
      %s37 = smul.addr %s33, 128
      %s38 = scalar_lea.hbm %s1, %s37
      %s39 = sshll.u32 [#allocation5], 4
      %s40 = int_to_ptr.vmem [resolvable:$true] %s39
      %45 = dma.hbm_to_vmem [thread:$0]  %s38, 256, %s40, [#allocation6], 128, 128, 8
    $region9: #{tpu_custom_call.1} parent=1 // pred_fallthru
      _
    // Predicated region
    $region10: #{tpu_custom_call.1} parent=1 // pred_check
      _
    $region11: #{tpu_custom_call.1} parent=1 // pred_check_branch
      %47 = sbr.rel (0) target = $region13
    $region12: #{tpu_custom_call.1} parent=1 // pred_region
      %48 = dma.done [#allocation3], 256
    $region13: #{tpu_custom_call.1} parent=1 // pred_fallthru
      _
    // Predicated region
    $region14: #{tpu_custom_call.1} parent=1 // pred_check
      _
    $region15: #{tpu_custom_call.1} parent=1 // pred_check_branch
      %50 = sbr.rel (0) target = $region17
    $region16: #{tpu_custom_call.1} parent=1 // pred_region
      %51 = dma.done [#allocation6], 256
    $region17: #{tpu_custom_call.1} parent=1 // pred_fallthru
      _
    %s52 = sadd.s32 0, 0
    %p53 = scmp.lt.s32.totalorder %s52, 0
    %s54 = scalar_select %p53, %s52, 0
    %s55 = smul.u32 2, %s54
    %s56 = sadd.s32 0, 0
    %p57 = scmp.lt.s32.totalorder %s56, 0
    %s58 = scalar_select %p57, %s56, 0
    %s59 = smul.u32 2, %s58
    %p60 = scmp.eq.s32.totalorder 0, 0
    // Predicated region
    $region18: #{tpu_custom_call.1} parent=1 // pred_check
      %p61 = pneg %p60
    $region19: #{tpu_custom_call.1} parent=1 // pred_check_branch
      %63 = sbr.rel (%p61) target = $region21
    $region20: #{tpu_custom_call.1} parent=1 // pred_region
      %64 = vst [vmem:[#allocation7] sm:$0xff] 0.0
    $region21: #{tpu_custom_call.1} parent=1 // pred_fallthru
      _
    %v65 = vld [vmem:[#allocation2] sm:$0xff]
    %v66 = vld [vmem:[#allocation2 + $0x8] sm:$0xff]
    %v67 = vld [vmem:[#allocation5] sm:$0xff]
    %v68 = vld [vmem:[#allocation5 + $0x8] sm:$0xff]
    %v69 = vsub.f32 %v65, %v67
    %v70 = vsub.f32 %v66, %v68
    %v71 = vand.u32 2147483647, %v69
    %v72 = vand.u32 2147483647, %v70
    %v73 = vadd.f32 %v71, %v72
    %v74 = vld [vmem:[#allocation7] sm:$0xff]
    %v75 = vadd.f32 %v74, %v73
    %76 = vst [vmem:[#allocation7] sm:$0xff] %v75
    // Predicated region
    $region22: #{tpu_custom_call.1} parent=1 // pred_check
      _
    $region23: #{tpu_custom_call.1} parent=1 // pred_check_branch
      %78 = sbr.rel (0) target = $region25
    $region24: #{tpu_custom_call.1} parent=1 // pred_region
      %s80 = ssub.s32 128, 128
      %81 = vsyncadd [#allocation4], %s80
      %s83 = sshll.u32 [#allocation7], 4
      %s84 = int_to_ptr.vmem [resolvable:$true] %s83
      %86 = dma.vmem_to_hbm [thread:$0]  %s84, 128, %s2, [#allocation4]
    $region25: #{tpu_custom_call.1} parent=1 // pred_fallthru
      _
    // Predicated region
    $region26: #{tpu_custom_call.1} parent=1 // pred_check
      _
    $region27: #{tpu_custom_call.1} parent=1 // pred_check_branch
      %88 = sbr.rel (0) target = $region29
    $region28: #{tpu_custom_call.1} parent=1 // pred_region
      %89 = dma.done [#allocation4], 128
    $region29: #{tpu_custom_call.1} parent=1 // pred_fallthru
      _
    %90 = vsyncpa [#allocation3], 1
    %91 = vsyncpa [#allocation6], 1
    %92 = vsyncpa [#allocation4], 1

</llo_original>
